<compile_context>
chip_gen: v6e
topology: v6e:2x2x1
jax: 0.10.0
libtpu: 0.0.40
codegen_flags: <defaults>
</compile_context>

<pallas_src>
import math

import jax
import jax.numpy as jnp
from jax.experimental import pallas as pl
from jax.experimental.pallas import tpu as pltpu


def _round_up(a, b):
    return (a + b - 1) // b * b


def _choose_tile(bn, per_row_bytes):
    """Rows of x processed per grid step.

    Targets ~2 MiB input/output blocks, multiples of 16, divisors of bn when
    possible (avoids pad + slice HBM copies), and >=2 grid steps (v7x megacore).
    """
    budget = 2 * 1024 * 1024
    cap = max(16, budget // max(1, per_row_bytes))
    if bn <= 16 or (bn < 32 and bn * per_row_bytes <= budget):
        return bn  # single block; "block == full dim" escapes (8,128) alignment
    tb_max = min(cap, max(16, (bn // 2) // 16 * 16))
    for align in (16, 8):
        start = (tb_max // align) * align
        for cand in range(start, align - 1, -align):
            if bn % cand == 0:
                return cand
    if bn * per_row_bytes <= 2 * budget:
        return bn  # one unaligned block beats a full pad+slice HBM round trip
    return max(16, (tb_max // 16) * 16)  # pad path (rare)


def _make_kernel(L, stride, num_patches, g, patch_len, compute_dtype):
    """Kernel: raw rows -> replication pad -> circular 3-tap rows -> MXU matmul."""
    N, C = num_patches, patch_len
    n_groups = N // g

    def kernel(x_ref, w_ref, o_ref):
        x_blk = x_ref[...]                                  # (TB, L), input dtype
        rows = x_blk.shape[0]
        # ReplicationPad1d((0, stride)): broadcast the last timestep.
        pad = jnp.broadcast_to(x_blk[:, -1:], (rows, stride))
        xpb = jnp.concatenate([x_blk, pad], axis=-1).astype(compute_dtype)  # (TB, L+stride)
        w = w_ref[...]                                      # (g*3C, g*d_model)
        for tg in range(n_groups):
            parts = []
            for r in range(g):
                t = tg * g + r
                for dk in (-1, 0, 1):                       # circular conv taps t-1, t, t+1
                    s = ((t + dk) % N) * stride
                    parts.append(xpb[:, s:s + C])
            row = jnp.concatenate(parts, axis=-1)           # (TB, g*3C) tap-major, grouped
            y = jnp.dot(row, w, preferred_element_type=jnp.float32)
            o_ref[:, tg, :] = y.astype(o_ref.dtype)         # lane-dense (TB, g*d_model) store
        # TODO(synk): for very large num_patches this unrolled per-group loop should
        # become a lax loop / wider sliding-window slices to bound kernel code size.

    return kernel


def patch_embedding(x, weight, patch_len, stride, *,
                    compute_dtype=jnp.bfloat16, out_dtype=None):
    """x: (B, n_vars, L); weight: (d_model, patch_len, 3) Conv1d weight.

    Returns (embeddings (B*n_vars, num_patches, d_model), n_vars). Dropout = identity.
    """
    B, n_vars, L = x.shape
    d_model = weight.shape[0]
    C = patch_len
    BN = B * n_vars
    N = (L + stride - C) // stride + 1
    out_dtype = x.dtype if out_dtype is None else out_dtype

    # Lane-dense output grouping: fuse g patches per output row so g*d_model % 128 == 0.
    g = 128 // math.gcd(128, d_model)
    if g > 1 and N % g != 0:
        g = 1  # TODO(synk): pad num_patches (or weight output columns) to keep lane-dense stores.
    K = g * 3 * C
    Ng = g * d_model

    # Packed conv weight, tap-major rows: w_cat = [W_{k=0}; W_{k=1}; W_{k=2}] (3C, d_model).
    w_cat = jnp.concatenate([weight[:, :, k].T for k in range(3)], axis=0)
    if g == 1:
        w_full = w_cat.astype(compute_dtype)
    else:
        # Block-diagonal copy: grouped tap row @ w_full == concat of g per-patch outputs.
        w_blocks = jnp.zeros((g, 3 * C, g, d_model), dtype=w_cat.dtype)
        for r in range(g):
            w_blocks = w_blocks.at[r, :, r, :].set(w_cat)
        w_full = w_blocks.reshape(K, Ng).astype(compute_dtype)

    x2 = x.reshape(BN, L)  # free metadata reshape; kernel reads raw rows exactly once
    per_row_bytes = max(L * x.dtype.itemsize,
                        N * d_model * jnp.dtype(out_dtype).itemsize)
    tb = _choose_tile(BN, per_row_bytes)
    bn_pad = _round_up(BN, tb)
    if bn_pad != BN:
        # TODO(synk): relying on Pallas partial trailing blocks would avoid this HBM copy.
        x2 = jnp.pad(x2, ((0, bn_pad - BN), (0, 0)))

    kernel = _make_kernel(L, stride, N, g, C, compute_dtype)
    out = pl.pallas_call(
        kernel,
        out_shape=jax.ShapeDtypeStruct((bn_pad, N // g, Ng), out_dtype),
        grid=(bn_pad // tb,),
        in_specs=[
            pl.BlockSpec((tb, L), lambda i: (i, 0)),     # streamed raw input rows
            pl.BlockSpec((K, Ng), lambda i: (0, 0)),     # resident packed weight
        ],
        out_specs=pl.BlockSpec((tb, N // g, Ng), lambda i: (i, 0, 0)),
        compiler_params=pltpu.CompilerParams(
            dimension_semantics=("parallel",),
            vmem_limit_bytes=32 * 1024 * 1024),
    )(x2, w_full)

    if bn_pad != BN:
        out = out[:BN]
    out = out.reshape(BN, N, d_model)  # pure row-major reinterpretation (free)
    # TODO(synk): nn.Dropout is identity in eval mode; training-mode dropout not implemented.
    return out, n_vars


def _reference(x, weight, patch_len, stride):
    """Pure-JAX reference mirroring the PyTorch module (eval mode, f32)."""
    B, n_vars, L = x.shape
    d_model = weight.shape[0]
    pad = jnp.repeat(x[:, :, -1:], stride, axis=-1)
    xp = jnp.concatenate([x, pad], axis=-1)
    num_patches = (L + stride - patch_len) // stride + 1
    idx = jnp.arange(num_patches)[:, None] * stride + jnp.arange(patch_len)[None, :]
    p = xp[:, :, idx].reshape(B * n_vars, num_patches, patch_len)
    xc = p.transpose(0, 2, 1)
    xc_pad = jnp.concatenate([xc[:, :, -1:], xc, xc[:, :, :1]], axis=-1)
    y = jnp.zeros((B * n_vars, num_patches, d_model), dtype=jnp.float32)
    for k in range(3):
        y = y + jnp.einsum(
            "bcn,oc->bno", xc_pad[:, :, k:k + num_patches], weight[:, :, k]
        )
    return y


if __name__ == "__main__":
    # Small, module-consistent shapes.
    B, n_vars, L = 2, 4, 64
    patch_len, stride, d_model = 16, 8, 32

    key = jax.random.PRNGKey(0)
    kx, kw = jax.random.split(key)
    x = jax.random.normal(kx, (B, n_vars, L), dtype=jnp.float32)

    # Deterministic Kaiming-normal init (mode='fan_in', nonlinearity='leaky_relu', a=0)
    fan_in = patch_len * 3
    std = math.sqrt(2.0) / math.sqrt(fan_in)
    weight = std * jax.random.normal(kw, (d_model, patch_len, 3), dtype=jnp.float32)

    ref = _reference(x, weight, patch_len, stride)

    # Exact-plumbing check: f32 matmul path must match the reference tightly.
    out_f32, nv = patch_embedding(x, weight, patch_len, stride, compute_dtype=jnp.float32)
    out_f32 = jax.block_until_ready(out_f32)
    assert nv == n_vars
    assert out_f32.shape == ref.shape, (out_f32.shape, ref.shape)
    assert jnp.allclose(out_f32, ref, atol=1e-3, rtol=1e-3), float(
        jnp.max(jnp.abs(out_f32 - ref))
    )

    # Default fast path: bf16 MXU inputs, f32 accumulation (looser tolerance).
    out, nv = patch_embedding(x, weight, patch_len, stride)
    out = jax.block_until_ready(out)
    assert nv == n_vars
    assert out.shape == ref.shape, (out.shape, ref.shape)
    assert jnp.allclose(out, ref, atol=5e-2, rtol=5e-2), float(
        jnp.max(jnp.abs(out - ref))
    )

    print("KERNEL_OK")
</pallas_src>

<mosaic_0001>
module attributes {stable_mosaic.version = 11 : i64} {
  func.func @kernel(%arg0: i32, %arg1: memref<8x64xf32, #tpu.memory_space<vmem>>, %arg2: memref<192x128xf32, #tpu.memory_space<vmem>>, %arg3: memref<8x2x128xf32, #tpu.memory_space<vmem>>) attributes {dimension_semantics = [#tpu.dimension_semantics<parallel>], iteration_bounds = array<i64: 1>, scalar_prefetch = 0 : i64, scratch_operands = 0 : i64, tpu.core_type = #tpu.core_type<tc>, window_params = [{transform_indices = @transform_0, window_bounds = array<i64: 8, 64>}, {pipeline_mode = #tpu.pipeline_mode<synchronous>, transform_indices = @transform_1, window_bounds = array<i64: 192, 128>}, {transform_indices = @transform_2, window_bounds = array<i64: 8, 2, 128>}]} {
    %c0 = arith.constant 0 : index
    %c0_0 = arith.constant 0 : index
    %0 = vector.load %arg1[%c0, %c0_0] : memref<8x64xf32, #tpu.memory_space<vmem>>, vector<8x64xf32>
    %1 = vector.extract_strided_slice %0 {offsets = [0, 63], sizes = [8, 1], strides = [1, 1]} : vector<8x64xf32> to vector<8x1xf32>
    %2 = vector.shape_cast %1 : vector<8x1xf32> to vector<8x1xf32>
    %3 = vector.broadcast %2 : vector<8x1xf32> to vector<8x8xf32>
    %4 = tpu.concatenate %0, %3 in 1 : vector<8x64xf32>, vector<8x8xf32> -> vector<8x72xf32>
    %c0_1 = arith.constant 0 : index
    %c0_2 = arith.constant 0 : index
    %5 = vector.load %arg2[%c0_1, %c0_2] : memref<192x128xf32, #tpu.memory_space<vmem>>, vector<192x128xf32>
    %6 = vector.extract_strided_slice %4 {offsets = [0, 56], sizes = [8, 16], strides = [1, 1]} : vector<8x72xf32> to vector<8x16xf32>
    %7 = vector.extract_strided_slice %4 {offsets = [0, 0], sizes = [8, 16], strides = [1, 1]} : vector<8x72xf32> to vector<8x16xf32>
    %8 = vector.extract_strided_slice %4 {offsets = [0, 8], sizes = [8, 16], strides = [1, 1]} : vector<8x72xf32> to vector<8x16xf32>
    %9 = vector.extract_strided_slice %4 {offsets = [0, 0], sizes = [8, 16], strides = [1, 1]} : vector<8x72xf32> to vector<8x16xf32>
    %10 = vector.extract_strided_slice %4 {offsets = [0, 8], sizes = [8, 16], strides = [1, 1]} : vector<8x72xf32> to vector<8x16xf32>
    %11 = vector.extract_strided_slice %4 {offsets = [0, 16], sizes = [8, 16], strides = [1, 1]} : vector<8x72xf32> to vector<8x16xf32>
    %12 = vector.extract_strided_slice %4 {offsets = [0, 8], sizes = [8, 16], strides = [1, 1]} : vector<8x72xf32> to vector<8x16xf32>
    %13 = vector.extract_strided_slice %4 {offsets = [0, 16], sizes = [8, 16], strides = [1, 1]} : vector<8x72xf32> to vector<8x16xf32>
    %14 = vector.extract_strided_slice %4 {offsets = [0, 24], sizes = [8, 16], strides = [1, 1]} : vector<8x72xf32> to vector<8x16xf32>
    %15 = vector.extract_strided_slice %4 {offsets = [0, 16], sizes = [8, 16], strides = [1, 1]} : vector<8x72xf32> to vector<8x16xf32>
    %16 = vector.extract_strided_slice %4 {offsets = [0, 24], sizes = [8, 16], strides = [1, 1]} : vector<8x72xf32> to vector<8x16xf32>
    %17 = vector.extract_strided_slice %4 {offsets = [0, 32], sizes = [8, 16], strides = [1, 1]} : vector<8x72xf32> to vector<8x16xf32>
    %18 = tpu.concatenate %6, %7, %8, %9, %10, %11, %12, %13, %14, %15, %16, %17 in 1 : vector<8x16xf32>, vector<8x16xf32>, vector<8x16xf32>, vector<8x16xf32>, vector<8x16xf32>, vector<8x16xf32>, vector<8x16xf32>, vector<8x16xf32>, vector<8x16xf32>, vector<8x16xf32>, vector<8x16xf32>, vector<8x16xf32> -> vector<8x192xf32>
    %cst = arith.constant dense<0.000000e+00> : vector<8x128xf32>
    %19 = tpu.matmul %18, %5, %cst {dimension_numbers = #tpu.dot_dimension_numbers<[1], [0], [0], [1], [0, 0, 1, 1], [], []>} : vector<8x192xf32>, vector<192x128xf32>, vector<8x128xf32> -> vector<8x128xf32>
    %c0_3 = arith.constant 0 : index
    %c0_4 = arith.constant 0 : index
    %c0_5 = arith.constant 0 : index
    %20 = vector.load %arg3[%c0_3, %c0_4, %c0_5] : memref<8x2x128xf32, #tpu.memory_space<vmem>>, vector<8x1x128xf32>
    %21 = vector.shape_cast %20 : vector<8x1x128xf32> to vector<8x128xf32>
    %22 = vector.shape_cast %19 : vector<8x128xf32> to vector<8x1x128xf32>
    tpu.vector_store %arg3[%c0_3, %c0_4, %c0_5], %22 {strides = array<i32>} : memref<8x2x128xf32, #tpu.memory_space<vmem>>, vector<8x1x128xf32>,
    %23 = vector.extract_strided_slice %4 {offsets = [0, 24], sizes = [8, 16], strides = [1, 1]} : vector<8x72xf32> to vector<8x16xf32>
    %24 = vector.extract_strided_slice %4 {offsets = [0, 32], sizes = [8, 16], strides = [1, 1]} : vector<8x72xf32> to vector<8x16xf32>
    %25 = vector.extract_strided_slice %4 {offsets = [0, 40], sizes = [8, 16], strides = [1, 1]} : vector<8x72xf32> to vector<8x16xf32>
    %26 = vector.extract_strided_slice %4 {offsets = [0, 32], sizes = [8, 16], strides = [1, 1]} : vector<8x72xf32> to vector<8x16xf32>
    %27 = vector.extract_strided_slice %4 {offsets = [0, 40], sizes = [8, 16], strides = [1, 1]} : vector<8x72xf32> to vector<8x16xf32>
    %28 = vector.extract_strided_slice %4 {offsets = [0, 48], sizes = [8, 16], strides = [1, 1]} : vector<8x72xf32> to vector<8x16xf32>
    %29 = vector.extract_strided_slice %4 {offsets = [0, 40], sizes = [8, 16], strides = [1, 1]} : vector<8x72xf32> to vector<8x16xf32>
    %30 = vector.extract_strided_slice %4 {offsets = [0, 48], sizes = [8, 16], strides = [1, 1]} : vector<8x72xf32> to vector<8x16xf32>
    %31 = vector.extract_strided_slice %4 {offsets = [0, 56], sizes = [8, 16], strides = [1, 1]} : vector<8x72xf32> to vector<8x16xf32>
    %32 = vector.extract_strided_slice %4 {offsets = [0, 48], sizes = [8, 16], strides = [1, 1]} : vector<8x72xf32> to vector<8x16xf32>
    %33 = vector.extract_strided_slice %4 {offsets = [0, 56], sizes = [8, 16], strides = [1, 1]} : vector<8x72xf32> to vector<8x16xf32>
    %34 = vector.extract_strided_slice %4 {offsets = [0, 0], sizes = [8, 16], strides = [1, 1]} : vector<8x72xf32> to vector<8x16xf32>
    %35 = tpu.concatenate %23, %24, %25, %26, %27, %28, %29, %30, %31, %32, %33, %34 in 1 : vector<8x16xf32>, vector<8x16xf32>, vector<8x16xf32>, vector<8x16xf32>, vector<8x16xf32>, vector<8x16xf32>, vector<8x16xf32>, vector<8x16xf32>, vector<8x16xf32>, vector<8x16xf32>, vector<8x16xf32>, vector<8x16xf32> -> vector<8x192xf32>
    %cst_6 = arith.constant dense<0.000000e+00> : vector<8x128xf32>
    %36 = tpu.matmul %35, %5, %cst_6 {dimension_numbers = #tpu.dot_dimension_numbers<[1], [0], [0], [1], [0, 0, 1, 1], [], []>} : vector<8x192xf32>, vector<192x128xf32>, vector<8x128xf32> -> vector<8x128xf32>
    %c0_7 = arith.constant 0 : index
    %c1 = arith.constant 1 : index
    %c0_8 = arith.constant 0 : index
    %37 = vector.load %arg3[%c0_7, %c1, %c0_8] : memref<8x2x128xf32, #tpu.memory_space<vmem>>, vector<8x1x128xf32>
    %38 = vector.shape_cast %37 : vector<8x1x128xf32> to vector<8x128xf32>
    %39 = vector.shape_cast %36 : vector<8x128xf32> to vector<8x1x128xf32>
    tpu.vector_store %arg3[%c0_7, %c1, %c0_8], %39 {strides = array<i32>} : memref<8x2x128xf32, #tpu.memory_space<vmem>>, vector<8x1x128xf32>,
    return
  }
  func.func @transform_0(%arg0: i32) -> (i32, i32) {
    %c0_i32 = arith.constant 0 : i32
    %c0_i32_0 = arith.constant 0 : i32
    return %arg0, %c0_i32 : i32, i32
  }
  func.func @transform_1(%arg0: i32) -> (i32, i32) {
    %c0_i32 = arith.constant 0 : i32
    %c0_i32_0 = arith.constant 0 : i32
    %c0_i32_1 = arith.constant 0 : i32
    return %c0_i32, %c0_i32_0 : i32, i32
  }
  func.func @transform_2(%arg0: i32) -> (i32, i32, i32) {
    %c0_i32 = arith.constant 0 : i32
    %c0_i32_0 = arith.constant 0 : i32
    %c0_i32_1 = arith.constant 0 : i32
    return %arg0, %c0_i32, %c0_i32_0 : i32, i32, i32
  }
}

</mosaic_0001>

<llo_original>
// kernel: tpu_custom_call.1
$region0: #{tpu_custom_call.1}
  #allocation0 [shape = 'u32[]', space=smem, size = 0x4, offset = 0x4, fixed_abs, tag = 'smem constant byte address 0x4 - core index']
  #allocation1 [shape = 'u32[144,128]{1,0:T(1,128)}', space=vmem, size = 0x12000, scoped, tag = 'internal scratch']
  %s0 = inlined_call_operand.hbm [shape: f32[8,64], index: 0, kind: input, shape index: {}]
  %s1 = inlined_call_operand.hbm [shape: f32[192,128], index: 1, kind: input, shape index: {}]
  %s2 = inlined_call_operand.hbm [shape: f32[8,2,128], index: 2, kind: output, shape index: {}]
  %s3 = sld [smem:[#allocation0]]
  $region26: #{tpu_custom_call.1} parent=0
    _
  %s5 = ssub.s32 1, %s3
  %s6 = scalar_select 0, %s5, %s3
  $region1: #{tpu_custom_call.1} parent=0
    #allocation2 [shape = 'u8[4096]{0}', space=vmem, size = 0x1000, scoped, tag = 'input window, operand 0, single buffered']
    #allocation3 [shape = 's32[1]{0}', space=sflag, size = 0x4, scoped, tag = 'scoped memory for tpu_custom_call.1']
    #allocation4 [shape = 's32[1]{0}', space=sflag, size = 0x4, scoped, tag = 'scoped memory for tpu_custom_call.1']
    #allocation5 [shape = 'u8[98304]{0}', space=vmem, size = 0x18000, scoped, tag = 'input window, operand 1, single buffered']
    #allocation6 [shape = 's32[1]{0}', space=sflag, size = 0x4, scoped, tag = 'scoped memory for tpu_custom_call.1']
    #allocation7 [shape = 'u8[8192]{0}', space=vmem, size = 0x2000, scoped, tag = 'output window, operand 0, single buffered']
    %7 = vsyncpa [#allocation3], 0
    %8 = vsyncpa [#allocation6], 0
    %9 = vsyncpa [#allocation4], 0
    // Predicated region
    $region2: #{tpu_custom_call.1} parent=1 // pred_check
      _
    $region3: #{tpu_custom_call.1} parent=1 // pred_check_branch
      %11 = sbr.rel (0) target = $region5
    $region4: #{tpu_custom_call.1} parent=1 // pred_region
      %s13 = ssub.s32 128, 128
      %14 = vsyncadd [#allocation3], %s13
      %s16 = sshll.u32 [#allocation2], 4
      %s17 = int_to_ptr.vmem [resolvable:$true] %s16
      %19 = dma.hbm_to_vmem [thread:$0]  %s0, 128, %s17, [#allocation3]
    $region5: #{tpu_custom_call.1} parent=1 // pred_fallthru
      _
    // Predicated region
    $region6: #{tpu_custom_call.1} parent=1 // pred_check
      _
    $region7: #{tpu_custom_call.1} parent=1 // pred_check_branch
      %21 = sbr.rel (0) target = $region9
    $region8: #{tpu_custom_call.1} parent=1 // pred_region
      %s23 = ssub.s32 3072, 3072
      %24 = vsyncadd [#allocation6], %s23
      %s25 = sshll.u32 [#allocation5], 4
      %s26 = int_to_ptr.vmem [resolvable:$true] %s25
      %31 = dma.hbm_to_vmem [thread:$0]  %s1, 3072, %s26, [#allocation6], 128, 128, 8
    $region9: #{tpu_custom_call.1} parent=1 // pred_fallthru
      _
    // Predicated region
    $region10: #{tpu_custom_call.1} parent=1 // pred_check
      _
    $region11: #{tpu_custom_call.1} parent=1 // pred_check_branch
      %33 = sbr.rel (0) target = $region13
    $region12: #{tpu_custom_call.1} parent=1 // pred_region
      %34 = dma.done [#allocation3], 128
    $region13: #{tpu_custom_call.1} parent=1 // pred_fallthru
      _
    // Predicated region
    $region14: #{tpu_custom_call.1} parent=1 // pred_check
      _
    $region15: #{tpu_custom_call.1} parent=1 // pred_check_branch
      %36 = sbr.rel (0) target = $region17
    $region16: #{tpu_custom_call.1} parent=1 // pred_region
      %37 = dma.done [#allocation6], 3072
    $region17: #{tpu_custom_call.1} parent=1 // pred_fallthru
      _
    %v38 = vld [vmem:[#allocation2] sm:$0xff]
    %40 = vset.pattern.permute.xlu0 63
    %41 = vperm.xlu0 %40, %v38
    %v42 = vpop.permute.xlu0 %41
    %vm44 = vcmask 523264
    %v45 = vsel %vm44, %v38, %v42
    %v46 = vld [vmem:[#allocation5] sm:$0xff]
    %v47 = vld [vmem:[#allocation5 + $0x8] sm:$0xff]
    %v48 = vld [vmem:[#allocation5 + $0x10] sm:$0xff]
    %v49 = vld [vmem:[#allocation5 + $0x18] sm:$0xff]
    %v50 = vld [vmem:[#allocation5 + $0x20] sm:$0xff]
    %v51 = vld [vmem:[#allocation5 + $0x28] sm:$0xff]
    %v52 = vld [vmem:[#allocation5 + $0x30] sm:$0xff]
    %v53 = vld [vmem:[#allocation5 + $0x38] sm:$0xff]
    %v54 = vld [vmem:[#allocation5 + $0x40] sm:$0xff]
    %v55 = vld [vmem:[#allocation5 + $0x48] sm:$0xff]
    %v56 = vld [vmem:[#allocation5 + $0x50] sm:$0xff]
    %v57 = vld [vmem:[#allocation5 + $0x58] sm:$0xff]
    %v58 = vld [vmem:[#allocation5 + $0x60] sm:$0xff]
    %v59 = vld [vmem:[#allocation5 + $0x68] sm:$0xff]
    %v60 = vld [vmem:[#allocation5 + $0x70] sm:$0xff]
    %v61 = vld [vmem:[#allocation5 + $0x78] sm:$0xff]
    %v62 = vld [vmem:[#allocation5 + $0x80] sm:$0xff]
    %v63 = vld [vmem:[#allocation5 + $0x88] sm:$0xff]
    %v64 = vld [vmem:[#allocation5 + $0x90] sm:$0xff]
    %v65 = vld [vmem:[#allocation5 + $0x98] sm:$0xff]
    %v66 = vld [vmem:[#allocation5 + $0xa0] sm:$0xff]
    %v67 = vld [vmem:[#allocation5 + $0xa8] sm:$0xff]
    %v68 = vld [vmem:[#allocation5 + $0xb0] sm:$0xff]
    %v69 = vld [vmem:[#allocation5 + $0xb8] sm:$0xff]
    %71 = vrot.lane.b32.xlu0 %v45, 72
    %v72 = vpop.permute.xlu0 %71
    %74 = vrot.lane.b32.xlu0 %v45, 16
    %v75 = vpop.permute.xlu0 %74
    %77 = vrot.lane.b32.xlu0 %v45, 24
    %v78 = vpop.permute.xlu0 %77
    %80 = vrot.lane.b32.xlu0 %v45, 48
    %v81 = vpop.permute.xlu0 %80
    %83 = vrot.lane.b32.xlu0 %v45, 56
    %v84 = vpop.permute.xlu0 %83
    %86 = vrot.lane.b32.xlu0 %v45, 64
    %v87 = vpop.permute.xlu0 %86
    %89 = vrot.lane.b32.xlu0 %v45, 88
    %v90 = vpop.permute.xlu0 %89
    %92 = vrot.lane.b32.xlu0 %v45, 96
    %v93 = vpop.permute.xlu0 %92
    %95 = vrot.lane.b32.xlu0 %v45, 104
    %v96 = vpop.permute.xlu0 %95
    %98 = vrot.lane.b32.xlu0 %v45, 8
    %v99 = vpop.permute.xlu0 %98
    %vm101 = vcmask 130048
    %v102 = vsel %vm101, %v72, %v75
    %vm103 = vcmask 261120
    %v104 = vsel %vm103, %v102, %v78
    %vm105 = vcmask 392192
    %v106 = vsel %vm105, %v104, %v81
    %v107 = vsel %vm44, %v106, %v84
    %vm108 = vcmask 654336
    %v109 = vsel %vm108, %v107, %v87
    %vm110 = vcmask 785408
    %v111 = vsel %vm110, %v109, %v90
    %vm112 = vcmask 916480
    %v113 = vsel %vm112, %v111, %v93
    %v114 = vsel %vm101, %v96, %v45
    %v115 = vsel %vm103, %v114, %v99
    %v116 = vsel %vm105, %v115, %v75
    %v118 = vsel %vm44, %v116, 0
    %120 = vmatprep.subr.mxu0 0.0
    %121 = vmatpush1.msra.mxu0 %v61
    %122 = vmatprep.subr.mxu0 0.0
    %123 = vmatpush1.msra.mxu0 %v60
    %124 = vmatprep.subr.mxu0 0.0
    %125 = vmatpush1.msra.mxu0 %v59
    %126 = vmatprep.subr.mxu0 0.0
    %127 = vmatpush1.msra.mxu0 %v58
    %128 = vmatprep.subr.mxu0 0.0
    %129 = vmatpush1.msra.mxu0 %v57
    %130 = vmatprep.subr.mxu0 0.0
    %131 = vmatpush1.msra.mxu0 %v56
    %132 = vmatprep.subr.mxu0 0.0
    %133 = vmatpush1.msra.mxu0 %v55
    %134 = vmatprep.subr.mxu0 0.0
    %135 = vmatpush1.msra.mxu0 %v54
    %136 = vmatprep.subr.mxu0 0.0
    %137 = vmatpush1.msra.mxu0 %v53
    %138 = vmatprep.subr.mxu0 0.0
    %139 = vmatpush1.msra.mxu0 %v52
    %140 = vmatprep.subr.mxu0 0.0
    %141 = vmatpush1.msra.mxu0 %v51
    %142 = vmatprep.subr.mxu0 0.0
    %143 = vmatpush1.msra.mxu0 %v50
    %144 = vmatprep.subr.mxu0 0.0
    %145 = vmatpush1.msra.mxu0 %v49
    %146 = vmatprep.subr.mxu0 0.0
    %147 = vmatpush1.msra.mxu0 %v48
    %148 = vmatprep.subr.mxu0 0.0
    %149 = vmatpush1.msra.mxu0 %v47
    %150 = vmatprep.subr.mxu0 0.0
    %151 = vmatpush1.msra.mxu0 %v46
    %152 = vmatprep.subr.mxu0 0.0
    %153 = vmatpush2.msra.mxu0 0.0
    %154 = vmatprep.subr.mxu0 0.0
    %155 = vmatpush2.msra.mxu0 0.0
    %156 = vmatprep.subr.mxu0 0.0
    %157 = vmatpush2.msra.mxu0 0.0
    %158 = vmatprep.subr.mxu0 0.0
    %159 = vmatpush2.msra.mxu0 0.0
    %160 = vmatprep.subr.mxu0 0.0
    %161 = vmatpush2.msra.mxu0 0.0
    %162 = vmatprep.subr.mxu0 0.0
    %163 = vmatpush2.msra.mxu0 0.0
    %164 = vmatprep.subr.mxu0 0.0
    %165 = vmatpush2.msra.mxu0 0.0
    %166 = vmatprep.subr.mxu0 0.0
    %167 = vmatpush2.msra.mxu0 0.0
    %168 = vmatprep.subr.mxu0 0.0
    %169 = vmatpush2.msra.mxu0 %v69
    %170 = vmatprep.subr.mxu0 0.0
    %171 = vmatpush2.msra.mxu0 %v68
    %172 = vmatprep.subr.mxu0 0.0
    %173 = vmatpush2.msra.mxu0 %v67
    %174 = vmatprep.subr.mxu0 0.0
    %175 = vmatpush2.msra.mxu0 %v66
    %176 = vmatprep.subr.mxu0 0.0
    %177 = vmatpush2.msra.mxu0 %v65
    %178 = vmatprep.subr.mxu0 0.0
    %179 = vmatpush2.msra.mxu0 %v64
    %180 = vmatprep.subr.mxu0 0.0
    %181 = vmatpush2.msra.mxu0 %v63
    %182 = vmatprep.subr.mxu0 0.0
    %183 = vmatpush2.msra.mxu0 %v62
    %184 = vmatprep.mubr.f32.mxu0 %v118
    %185 = vmatmul.mubr.f32.gmra.mxu0 %v113
    %v186 = vpop.f32.mrf.mxu0
    %v187 = vadd.f32 0.0, %v186
    %v188 = vpop.f32.mrf.mxu0
    %189 = vdwg.mxu0
    %v191 = vcombine.high %v187, %v187
    %v193 = vunpack.c.l.s4 1966171168
    %v194 = vunpack.c.0.s8 %v193
    %v195 = vlaneseq
    %v196 = vshrl.u32 %v195, 7
    %v197 = vsub.s32 %v194, %v196
    %v198 = vrot.slane %v187, %v197
    %v200 = vunpack.c.l.s4 1966171168
    %v201 = vunpack.c.0.s8 %v200
    %v202 = vlaneseq
    %v203 = vshrl.u32 %v202, 7
    %v204 = vsub.s32 %v201, %v203
    %v205 = vrot.slane %v191, %v204
    %v206 = vcombine.high %v198, %v198
    %v207 = vcombine.high %v205, %v205
    %v209 = vunpack.c.l.s4 1966171168
    %v210 = vunpack.c.0.s8 %v209
    %v211 = vlaneseq
    %v212 = vshrl.u32 %v211, 7
    %v213 = vsub.s32 %v210, %v212
    %v214 = vrot.slane %v198, %v213
    %v216 = vunpack.c.l.s4 1966171168
    %v217 = vunpack.c.0.s8 %v216
    %v218 = vlaneseq
    %v219 = vshrl.u32 %v218, 7
    %v220 = vsub.s32 %v217, %v219
    %v221 = vrot.slane %v205, %v220
    %v223 = vunpack.c.l.s4 1966171168
    %v224 = vunpack.c.0.s8 %v223
    %v225 = vlaneseq
    %v226 = vshrl.u32 %v225, 7
    %v227 = vsub.s32 %v224, %v226
    %v228 = vrot.slane %v206, %v227
    %v230 = vunpack.c.l.s4 1966171168
    %v231 = vunpack.c.0.s8 %v230
    %v232 = vlaneseq
    %v233 = vshrl.u32 %v232, 7
    %v234 = vsub.s32 %v231, %v233
    %v235 = vrot.slane %v207, %v234
    %v236 = vcombine.high %v214, %v214
    %v237 = vcombine.high %v221, %v221
    %v238 = vcombine.high %v228, %v228
    %v239 = vcombine.high %v235, %v235
    %248 = vst [vmem:[#allocation7] sm:$0x1] %v214
    %249 = vst [vmem:[#allocation7 + $0x2] sm:$0x1] %v228
    %250 = vst [vmem:[#allocation7 + $0x4] sm:$0x1] %v236
    %251 = vst [vmem:[#allocation7 + $0x6] sm:$0x1] %v238
    %252 = vst [vmem:[#allocation7 + $0x8] sm:$0x1] %v221
    %253 = vst [vmem:[#allocation7 + $0xa] sm:$0x1] %v235
    %254 = vst [vmem:[#allocation7 + $0xc] sm:$0x1] %v237
    %255 = vst [vmem:[#allocation7 + $0xe] sm:$0x1] %v239
    %256 = vrot.lane.b32.xlu0 %v45, 112
    %v257 = vpop.permute.xlu0 %256
    %259 = vrot.lane.b32.xlu0 %v45, 120
    %v260 = vpop.permute.xlu0 %259
    %262 = vrot.lane.b32.xlu0 %v45, 32
    %v263 = vpop.permute.xlu0 %262
    %v265 = vsel %vm101, %v96, %v257
    %v266 = vsel %vm103, %v265, %v260
    %v267 = vsel %vm105, %v266, %v75
    %v268 = vsel %vm44, %v267, %v78
    %v269 = vsel %vm108, %v268, %v263
    %v270 = vsel %vm110, %v269, %v84
    %v271 = vsel %vm112, %v270, %v87
    %v272 = vsel %vm101, %v72, %v93
    %v273 = vsel %vm103, %v272, %v96
    %v274 = vsel %vm105, %v273, %v81
    %v276 = vsel %vm44, %v274, 0
    %278 = vmatprep.subr.mxu0 0.0
    %279 = vmatpush1.msra.mxu0 %v61
    %280 = vmatprep.subr.mxu0 0.0
    %281 = vmatpush1.msra.mxu0 %v60
    %282 = vmatprep.subr.mxu0 0.0
    %283 = vmatpush1.msra.mxu0 %v59
    %284 = vmatprep.subr.mxu0 0.0
    %285 = vmatpush1.msra.mxu0 %v58
    %286 = vmatprep.subr.mxu0 0.0
    %287 = vmatpush1.msra.mxu0 %v57
    %288 = vmatprep.subr.mxu0 0.0
    %289 = vmatpush1.msra.mxu0 %v56
    %290 = vmatprep.subr.mxu0 0.0
    %291 = vmatpush1.msra.mxu0 %v55
    %292 = vmatprep.subr.mxu0 0.0
    %293 = vmatpush1.msra.mxu0 %v54
    %294 = vmatprep.subr.mxu0 0.0
    %295 = vmatpush1.msra.mxu0 %v53
    %296 = vmatprep.subr.mxu0 0.0
    %297 = vmatpush1.msra.mxu0 %v52
    %298 = vmatprep.subr.mxu0 0.0
    %299 = vmatpush1.msra.mxu0 %v51
    %300 = vmatprep.subr.mxu0 0.0
    %301 = vmatpush1.msra.mxu0 %v50
    %302 = vmatprep.subr.mxu0 0.0
    %303 = vmatpush1.msra.mxu0 %v49
    %304 = vmatprep.subr.mxu0 0.0
    %305 = vmatpush1.msra.mxu0 %v48
    %306 = vmatprep.subr.mxu0 0.0
    %307 = vmatpush1.msra.mxu0 %v47
    %308 = vmatprep.subr.mxu0 0.0
    %309 = vmatpush1.msra.mxu0 %v46
    %310 = vmatprep.subr.mxu0 0.0
    %311 = vmatpush2.msra.mxu0 0.0
    %312 = vmatprep.subr.mxu0 0.0
    %313 = vmatpush2.msra.mxu0 0.0
    %314 = vmatprep.subr.mxu0 0.0
    %315 = vmatpush2.msra.mxu0 0.0
    %316 = vmatprep.subr.mxu0 0.0
    %317 = vmatpush2.msra.mxu0 0.0
    %318 = vmatprep.subr.mxu0 0.0
    %319 = vmatpush2.msra.mxu0 0.0
    %320 = vmatprep.subr.mxu0 0.0
    %321 = vmatpush2.msra.mxu0 0.0
    %322 = vmatprep.subr.mxu0 0.0
    %323 = vmatpush2.msra.mxu0 0.0
    %324 = vmatprep.subr.mxu0 0.0
    %325 = vmatpush2.msra.mxu0 0.0
    %326 = vmatprep.subr.mxu0 0.0
    %327 = vmatpush2.msra.mxu0 %v69
    %328 = vmatprep.subr.mxu0 0.0
    %329 = vmatpush2.msra.mxu0 %v68
    %330 = vmatprep.subr.mxu0 0.0
    %331 = vmatpush2.msra.mxu0 %v67
    %332 = vmatprep.subr.mxu0 0.0
    %333 = vmatpush2.msra.mxu0 %v66
    %334 = vmatprep.subr.mxu0 0.0
    %335 = vmatpush2.msra.mxu0 %v65
    %336 = vmatprep.subr.mxu0 0.0
    %337 = vmatpush2.msra.mxu0 %v64
    %338 = vmatprep.subr.mxu0 0.0
    %339 = vmatpush2.msra.mxu0 %v63
    %340 = vmatprep.subr.mxu0 0.0
    %341 = vmatpush2.msra.mxu0 %v62
    %342 = vmatprep.mubr.f32.mxu0 %v276
    %343 = vmatmul.mubr.f32.gmra.mxu0 %v271
    %v344 = vpop.f32.mrf.mxu0
    %v345 = vadd.f32 0.0, %v344
    %v346 = vpop.f32.mrf.mxu0
    %347 = vdwg.mxu0
    %v349 = vcombine.high %v345, %v345
    %v351 = vunpack.c.l.s4 1966171168
    %v352 = vunpack.c.0.s8 %v351
    %v353 = vlaneseq
    %v354 = vshrl.u32 %v353, 7
    %v355 = vsub.s32 %v352, %v354
    %v356 = vrot.slane %v345, %v355
    %v358 = vunpack.c.l.s4 1966171168
    %v359 = vunpack.c.0.s8 %v358
    %v360 = vlaneseq
    %v361 = vshrl.u32 %v360, 7
    %v362 = vsub.s32 %v359, %v361
    %v363 = vrot.slane %v349, %v362
    %v364 = vcombine.high %v356, %v356
    %v365 = vcombine.high %v363, %v363
    %v367 = vunpack.c.l.s4 1966171168
    %v368 = vunpack.c.0.s8 %v367
    %v369 = vlaneseq
    %v370 = vshrl.u32 %v369, 7
    %v371 = vsub.s32 %v368, %v370
    %v372 = vrot.slane %v356, %v371
    %v374 = vunpack.c.l.s4 1966171168
    %v375 = vunpack.c.0.s8 %v374
    %v376 = vlaneseq
    %v377 = vshrl.u32 %v376, 7
    %v378 = vsub.s32 %v375, %v377
    %v379 = vrot.slane %v363, %v378
    %v381 = vunpack.c.l.s4 1966171168
    %v382 = vunpack.c.0.s8 %v381
    %v383 = vlaneseq
    %v384 = vshrl.u32 %v383, 7
    %v385 = vsub.s32 %v382, %v384
    %v386 = vrot.slane %v364, %v385
    %v388 = vunpack.c.l.s4 1966171168
    %v389 = vunpack.c.0.s8 %v388
    %v390 = vlaneseq
    %v391 = vshrl.u32 %v390, 7
    %v392 = vsub.s32 %v389, %v391
    %v393 = vrot.slane %v365, %v392
    %v394 = vcombine.high %v372, %v372
    %v395 = vcombine.high %v379, %v379
    %v396 = vcombine.high %v386, %v386
    %v397 = vcombine.high %v393, %v393
    %406 = vst [vmem:[#allocation7 + $0x1] sm:$0x1] %v372
    %407 = vst [vmem:[#allocation7 + $0x3] sm:$0x1] %v386
    %408 = vst [vmem:[#allocation7 + $0x5] sm:$0x1] %v394
    %409 = vst [vmem:[#allocation7 + $0x7] sm:$0x1] %v396
    %410 = vst [vmem:[#allocation7 + $0x9] sm:$0x1] %v379
    %411 = vst [vmem:[#allocation7 + $0xb] sm:$0x1] %v393
    %412 = vst [vmem:[#allocation7 + $0xd] sm:$0x1] %v395
    %413 = vst [vmem:[#allocation7 + $0xf] sm:$0x1] %v397
    // Predicated region
    $region18: #{tpu_custom_call.1} parent=1 // pred_check
      _
    $region19: #{tpu_custom_call.1} parent=1 // pred_check_branch
      %415 = sbr.rel (0) target = $region21
    $region20: #{tpu_custom_call.1} parent=1 // pred_region
      %s417 = ssub.s32 256, 256
      %418 = vsyncadd [#allocation4], %s417
      %s419 = sshll.u32 [#allocation7], 4
      %s420 = int_to_ptr.vmem [resolvable:$true] %s419
      %425 = dma.vmem_to_hbm [thread:$0]  %s420, 256, %s2, [#allocation4], 32, 32, 2
    $region21: #{tpu_custom_call.1} parent=1 // pred_fallthru
      _
    // Predicated region
    $region22: #{tpu_custom_call.1} parent=1 // pred_check
      _
    $region23: #{tpu_custom_call.1} parent=1 // pred_check_branch
      %427 = sbr.rel (0) target = $region25
    $region24: #{tpu_custom_call.1} parent=1 // pred_region
      %428 = dma.done [#allocation4], 256
    $region25: #{tpu_custom_call.1} parent=1 // pred_fallthru
      _
    %429 = vsyncpa [#allocation3], 1
    %430 = vsyncpa [#allocation6], 1
    %431 = vsyncpa [#allocation4], 1

</llo_original>
